<compile_context>
chip_gen: v7x
topology: tpu7x:2x2x1
jax: 0.10.0
libtpu: 0.0.40
codegen_flags: <defaults>
</compile_context>

<pallas_src>
import jax
import jax.numpy as jnp
from jax.experimental import pallas as pl
from jax.experimental.pallas import tpu as pltpu


def _round_up(x, m):
    return ((x + m - 1) // m) * m


# ------------------------------- kernel -------------------------------------

def _decoder_kernel(u_ref, v_ref, wcat_ref, c_ref, o_ref):
    """One edge tile of the decoder.

    u_ref    : (TE, Dp)  bf16   gathered user features (D zero-padded to 128)
    v_ref    : (TE, Dp)  bf16   gathered item features
    wcat_ref : (Dp, NW*Dp) bf16 concatenated basis weights, W_cat[:, i*Dp:(i+1)*Dp] = W_i
    c_ref    : (NW, NC)  f32    classifier weights (full, unpadded)
    o_ref    : (TE, NC)  f32    output logits (post-ReLU), narrow store
    """
    num_weights, nc = c_ref.shape
    dp = v_ref.shape[1]
    te = u_ref.shape[0]

    # Single fused MXU matmul over all basis weights: bf16 inputs, f32 accumulation.
    tmp_all = jnp.dot(u_ref[...], wcat_ref[...],
                      preferred_element_type=jnp.float32)          # (TE, NW*Dp) f32
    v = v_ref[...].astype(jnp.float32)                              # (TE, Dp) f32
    c = c_ref[...].astype(jnp.float32)                              # hoisted out of loop

    out = jnp.zeros((te, nc), jnp.float32)
    for i in range(num_weights):  # small & static -> unrolled
        tmp_i = tmp_all[:, i * dp:(i + 1) * dp]                     # 128-aligned static slice
        basis_i = jnp.sum(tmp_i * v, axis=1, keepdims=True)         # (TE, 1) XLU lane-reduce
        # Classifier contraction as VPU broadcast-FMA onto the narrow output
        # (MXU would be >99% idle on a 3x5 contraction).
        out = out + basis_i * c[i:i + 1, :]                         # (TE, NC)

    o_ref[...] = jnp.maximum(out, 0.0).astype(o_ref.dtype)          # ReLU


# ------------------------------- wrapper -------------------------------------

def decoder_forward(user_inputs, item_inputs, user_indices, item_indices,
                    weights, weight_classifier, *, tile_edges=None):
    """Pallas implementation of Decoder.forward (dropout p=0.0 -> identity)."""
    num_edges = user_indices.shape[0]
    input_dim = user_inputs.shape[1]
    num_weights = weights.shape[0]
    num_classes = weight_classifier.shape[1]

    # Lane-pad the (small) feature TABLES along D; pad the index vectors along E.
    dp = _round_up(input_dim, 128)
    u_tab = jnp.pad(user_inputs, ((0, 0), (0, dp - input_dim))).astype(jnp.bfloat16)
    i_tab = jnp.pad(item_inputs, ((0, 0), (0, dp - input_dim))).astype(jnp.bfloat16)

    # bf16 blocks pack 16 rows/sublane-group -> edge tile must be a multiple of 16.
    if tile_edges is None:
        tile_edges = 1024
    tile_edges = max(16, _round_up(min(tile_edges, _round_up(num_edges, 16)), 16))
    e_pad = _round_up(num_edges, tile_edges)

    uidx = jnp.pad(user_indices, (0, e_pad - num_edges))   # padded edges gather row 0,
    iidx = jnp.pad(item_indices, (0, e_pad - num_edges))   # sliced off after the kernel.

    # Single XLA gather per stream, already (E_pad, Dp) bf16 -> no extra pad pass.
    u_p = u_tab[uidx]
    v_p = i_tab[iidx]

    # (NW, Dp, Dp) -> (Dp, NW*Dp) so that W_cat[:, i*Dp:(i+1)*Dp] == W_i.
    w_p = jnp.pad(weights, ((0, 0), (0, dp - input_dim), (0, dp - input_dim)))
    w_cat = jnp.transpose(w_p, (1, 0, 2)).reshape(dp, num_weights * dp)
    w_cat = w_cat.astype(jnp.bfloat16)
    c_f32 = weight_classifier.astype(jnp.float32)           # (NW, NC), unpadded

    grid = (e_pad // tile_edges,)

    out_p = pl.pallas_call(
        _decoder_kernel,
        out_shape=jax.ShapeDtypeStruct((e_pad, num_classes), jnp.float32),
        grid_spec=pltpu.PrefetchScalarGridSpec(
            num_scalar_prefetch=0,
            grid=grid,
            in_specs=[
                # edge tiles of gathered bf16 features (pipelined / double-buffered)
                pl.BlockSpec((tile_edges, dp), lambda i: (i, 0)),
                pl.BlockSpec((tile_edges, dp), lambda i: (i, 0)),
                # full weight stacks: same block every grid step -> resident
                pl.BlockSpec((dp, num_weights * dp), lambda i: (0, 0)),
                pl.BlockSpec((num_weights, num_classes), lambda i: (0, 0)),
            ],
            # narrow output block: last dim == full NC (masked vst, ~25x fewer bytes)
            out_specs=pl.BlockSpec((tile_edges, num_classes), lambda i: (i, 0)),
        ),
        compiler_params=pltpu.CompilerParams(
            dimension_semantics=("parallel",),
            vmem_limit_bytes=32 * 1024 * 1024),
    )(u_p, v_p, w_cat, c_f32)

    return out_p[:num_edges, :]


# ----------------------- deterministic parameter init -----------------------

def _orthogonal(key, n, gain):
    a = jax.random.normal(key, (n, n), dtype=jnp.float32)
    q, r = jnp.linalg.qr(a)
    q = q * jnp.sign(jnp.diag(r))
    return gain * q


def _xavier_uniform(key, shape):
    fan_in, fan_out = shape
    limit = (6.0 / (fan_in + fan_out)) ** 0.5
    return jax.random.uniform(key, shape, jnp.float32, -limit, limit)


def init_decoder_params(key, input_dim, num_weights, num_classes):
    keys = jax.random.split(key, num_weights + 1)
    ws = jnp.stack([_orthogonal(keys[i], input_dim, gain=1.1)
                    for i in range(num_weights)], axis=0)
    wc = _xavier_uniform(keys[-1], (num_weights, num_classes))
    return ws, wc


# --------------------------- pure-JAX reference -----------------------------

def decoder_reference(user_inputs, item_inputs, user_indices, item_indices,
                      weights, weight_classifier):
    u = user_inputs[user_indices]
    v = item_inputs[item_indices]
    basis = jnp.stack(
        [jnp.sum((u @ weights[i]) * v, axis=1) for i in range(weights.shape[0])],
        axis=1)
    return jax.nn.relu(basis @ weight_classifier)


if __name__ == "__main__":
    input_dim = 32
    num_weights = 3
    num_classes = 5
    num_users = 16
    num_items = 12
    num_edges = 64
    tile_edges = 32   # -> grid of 2 edge tiles (pipelined, megacore-shardable)

    key = jax.random.PRNGKey(0)
    k_u, k_i, k_ui, k_ii, k_p = jax.random.split(key, 5)

    user_inputs = jax.random.normal(k_u, (num_users, input_dim), jnp.float32)
    item_inputs = jax.random.normal(k_i, (num_items, input_dim), jnp.float32)
    user_indices = jax.random.randint(k_ui, (num_edges,), 0, num_users)
    item_indices = jax.random.randint(k_ii, (num_edges,), 0, num_items)

    weights, weight_classifier = init_decoder_params(
        k_p, input_dim, num_weights, num_classes)

    out = decoder_forward(user_inputs, item_inputs, user_indices, item_indices,
                          weights, weight_classifier, tile_edges=tile_edges)
    out = jax.block_until_ready(out)
    assert out.shape == (num_edges, num_classes)

    # bf16-matched reference (kernel quantizes features/basis weights to bf16,
    # accumulates in f32) -> tight tolerance.
    uq = user_inputs.astype(jnp.bfloat16).astype(jnp.float32)
    iq = item_inputs.astype(jnp.bfloat16).astype(jnp.float32)
    wq = weights.astype(jnp.bfloat16).astype(jnp.float32)
    ref_q = decoder_reference(uq, iq, user_indices, item_indices, wq,
                              weight_classifier)
    assert jnp.allclose(out, ref_q, atol=2e-3, rtol=2e-3), "mismatch vs bf16-matched reference"

    # Sanity check against the full-f32 reference (loose: bf16 input rounding).
    ref = decoder_reference(user_inputs, item_inputs, user_indices, item_indices,
                            weights, weight_classifier)
    assert jnp.allclose(out, ref, atol=0.25, rtol=0.05), "mismatch vs f32 reference"

    print("KERNEL_OK")
</pallas_src>

<mosaic_0001>
module attributes {stable_mosaic.version = 11 : i64} {
  func.func @_decoder_kernel(%arg0: i32, %arg1: memref<32x128xbf16, #tpu.memory_space<vmem>>, %arg2: memref<32x128xbf16, #tpu.memory_space<vmem>>, %arg3: memref<128x384xbf16, #tpu.memory_space<vmem>>, %arg4: memref<3x5xf32, #tpu.memory_space<vmem>>, %arg5: memref<32x5xf32, #tpu.memory_space<vmem>>) attributes {dimension_semantics = [#tpu.dimension_semantics<parallel>], iteration_bounds = array<i64: 2>, scalar_prefetch = 0 : i64, scratch_operands = 0 : i64, tpu.core_type = #tpu.core_type<tc>, window_params = [{transform_indices = @transform_0, window_bounds = array<i64: 32, 128>}, {transform_indices = @transform_1, window_bounds = array<i64: 32, 128>}, {pipeline_mode = #tpu.pipeline_mode<synchronous>, transform_indices = @transform_2, window_bounds = array<i64: 128, 384>}, {pipeline_mode = #tpu.pipeline_mode<synchronous>, transform_indices = @transform_3, window_bounds = array<i64: 3, 5>}, {transform_indices = @transform_4, window_bounds = array<i64: 32, 5>}]} {
    %c0 = arith.constant 0 : index
    %c0_0 = arith.constant 0 : index
    %0 = vector.load %arg1[%c0, %c0_0] : memref<32x128xbf16, #tpu.memory_space<vmem>>, vector<32x128xbf16>
    %c0_1 = arith.constant 0 : index
    %c0_2 = arith.constant 0 : index
    %1 = vector.load %arg3[%c0_1, %c0_2] : memref<128x384xbf16, #tpu.memory_space<vmem>>, vector<128x384xbf16>
    %cst = arith.constant dense<0.000000e+00> : vector<32x384xf32>
    %2 = tpu.matmul %0, %1, %cst {dimension_numbers = #tpu.dot_dimension_numbers<[1], [0], [0], [1], [0, 0, 1, 1], [], []>} : vector<32x128xbf16>, vector<128x384xbf16>, vector<32x384xf32> -> vector<32x384xf32>
    %c0_3 = arith.constant 0 : index
    %c0_4 = arith.constant 0 : index
    %3 = vector.load %arg2[%c0_3, %c0_4] : memref<32x128xbf16, #tpu.memory_space<vmem>>, vector<32x128xbf16>
    %4 = arith.extf %3 : vector<32x128xbf16> to vector<32x128xf32>
    %c0_5 = arith.constant 0 : index
    %c0_6 = arith.constant 0 : index
    %5 = vector.load %arg4[%c0_5, %c0_6] : memref<3x5xf32, #tpu.memory_space<vmem>>, vector<3x5xf32>
    %cst_7 = arith.constant 0.000000e+00 : f32
    %6 = vector.broadcast %cst_7 : f32 to vector<32x5xf32>
    %7 = vector.extract_strided_slice %2 {offsets = [0, 0], sizes = [32, 128], strides = [1, 1]} : vector<32x384xf32> to vector<32x128xf32>
    %8 = arith.mulf %7, %4 : vector<32x128xf32>
    %cst_8 = arith.constant dense<0.000000e+00> : vector<32xf32>
    %9 = vector.multi_reduction <add>, %8, %cst_8 [1] : vector<32x128xf32> to vector<32xf32>
    %10 = vector.shape_cast %9 : vector<32xf32> to vector<32x1xf32>
    %11 = vector.extract_strided_slice %5 {offsets = [0, 0], sizes = [1, 5], strides = [1, 1]} : vector<3x5xf32> to vector<1x5xf32>
    %12 = vector.broadcast %10 : vector<32x1xf32> to vector<32x5xf32>
    %13 = vector.broadcast %11 : vector<1x5xf32> to vector<32x5xf32>
    %14 = arith.mulf %12, %13 : vector<32x5xf32>
    %15 = arith.addf %6, %14 : vector<32x5xf32>
    %16 = vector.extract_strided_slice %2 {offsets = [0, 128], sizes = [32, 128], strides = [1, 1]} : vector<32x384xf32> to vector<32x128xf32>
    %17 = arith.mulf %16, %4 : vector<32x128xf32>
    %cst_9 = arith.constant dense<0.000000e+00> : vector<32xf32>
    %18 = vector.multi_reduction <add>, %17, %cst_9 [1] : vector<32x128xf32> to vector<32xf32>
    %19 = vector.shape_cast %18 : vector<32xf32> to vector<32x1xf32>
    %20 = vector.extract_strided_slice %5 {offsets = [1, 0], sizes = [1, 5], strides = [1, 1]} : vector<3x5xf32> to vector<1x5xf32>
    %21 = vector.broadcast %19 : vector<32x1xf32> to vector<32x5xf32>
    %22 = vector.broadcast %20 : vector<1x5xf32> to vector<32x5xf32>
    %23 = arith.mulf %21, %22 : vector<32x5xf32>
    %24 = arith.addf %15, %23 : vector<32x5xf32>
    %25 = vector.extract_strided_slice %2 {offsets = [0, 256], sizes = [32, 128], strides = [1, 1]} : vector<32x384xf32> to vector<32x128xf32>
    %26 = arith.mulf %25, %4 : vector<32x128xf32>
    %cst_10 = arith.constant dense<0.000000e+00> : vector<32xf32>
    %27 = vector.multi_reduction <add>, %26, %cst_10 [1] : vector<32x128xf32> to vector<32xf32>
    %28 = vector.shape_cast %27 : vector<32xf32> to vector<32x1xf32>
    %29 = vector.extract_strided_slice %5 {offsets = [2, 0], sizes = [1, 5], strides = [1, 1]} : vector<3x5xf32> to vector<1x5xf32>
    %30 = vector.broadcast %28 : vector<32x1xf32> to vector<32x5xf32>
    %31 = vector.broadcast %29 : vector<1x5xf32> to vector<32x5xf32>
    %32 = arith.mulf %30, %31 : vector<32x5xf32>
    %33 = arith.addf %24, %32 : vector<32x5xf32>
    %cst_11 = arith.constant 0.000000e+00 : f32
    %34 = vector.broadcast %cst_11 : f32 to vector<32x5xf32>
    %35 = arith.maximumf %33, %34 : vector<32x5xf32>
    %c0_12 = arith.constant 0 : index
    %c0_13 = arith.constant 0 : index
    %36 = vector.load %arg5[%c0_12, %c0_13] : memref<32x5xf32, #tpu.memory_space<vmem>>, vector<32x5xf32>
    tpu.vector_store %arg5[%c0_12, %c0_13], %35 {strides = array<i32>} : memref<32x5xf32, #tpu.memory_space<vmem>>, vector<32x5xf32>,
    return
  }
  func.func @transform_0(%arg0: i32) -> (i32, i32) {
    %c0_i32 = arith.constant 0 : i32
    %c0_i32_0 = arith.constant 0 : i32
    return %arg0, %c0_i32 : i32, i32
  }
  func.func @transform_1(%arg0: i32) -> (i32, i32) {
    %c0_i32 = arith.constant 0 : i32
    %c0_i32_0 = arith.constant 0 : i32
    return %arg0, %c0_i32 : i32, i32
  }
  func.func @transform_2(%arg0: i32) -> (i32, i32) {
    %c0_i32 = arith.constant 0 : i32
    %c0_i32_0 = arith.constant 0 : i32
    %c0_i32_1 = arith.constant 0 : i32
    return %c0_i32, %c0_i32_0 : i32, i32
  }
  func.func @transform_3(%arg0: i32) -> (i32, i32) {
    %c0_i32 = arith.constant 0 : i32
    %c0_i32_0 = arith.constant 0 : i32
    %c0_i32_1 = arith.constant 0 : i32
    return %c0_i32, %c0_i32_0 : i32, i32
  }
  func.func @transform_4(%arg0: i32) -> (i32, i32) {
    %c0_i32 = arith.constant 0 : i32
    %c0_i32_0 = arith.constant 0 : i32
    return %arg0, %c0_i32 : i32, i32
  }
}

</mosaic_0001>

<llo_original>
// kernel: tpu_custom_call.1
$region0: #{tpu_custom_call.1}
  #allocation0 [shape = 'u32[]', space=smem, size = 0x4, offset = 0x4, fixed_abs, tag = 'smem constant byte address 0x4 - core index']
  #allocation1 [shape = 'u32[144,128]{1,0:T(1,128)}', space=vmem, size = 0x12000, scoped, tag = 'internal scratch']
  %s0 = inlined_call_operand.hbm [shape: bf16[64,128], index: 0, kind: input, shape index: {}]
  %s1 = inlined_call_operand.hbm [shape: bf16[64,128], index: 1, kind: input, shape index: {}]
  %s2 = inlined_call_operand.hbm [shape: bf16[128,384], index: 2, kind: input, shape index: {}]
  %s3 = inlined_call_operand.vmem [shape: f32[3,5], index: 3, kind: input, shape index: {}]
  %s4 = inlined_call_operand.vmem [shape: f32[64,5], index: 4, kind: output, shape index: {}]
  %s5 = sld [smem:[#allocation0]]
  $region61: #{tpu_custom_call.1} parent=0
    _
  %s7 = ssub.s32 1, %s5
  %s8 = scalar_select 0, %s7, %s5
  $region1: #{tpu_custom_call.1} parent=0
    #allocation2 [shape = 'u8[16384]{0}', space=vmem, size = 0x4000, scoped, tag = 'input window, operand 0']
    #allocation3 [shape = 's32[2]{0}', space=sflag, size = 0x8, scoped, tag = 'scoped memory for tpu_custom_call.1']
    #allocation4 [shape = 'u8[16384]{0}', space=vmem, size = 0x4000, scoped, tag = 'input window, operand 1']
    #allocation5 [shape = 's32[2]{0}', space=sflag, size = 0x8, scoped, tag = 'scoped memory for tpu_custom_call.1']
    #allocation6 [shape = 'u8[98304]{0}', space=vmem, size = 0x18000, scoped, tag = 'input window, operand 2, single buffered']
    %9 = vsyncpa [#allocation3], 0
    %s10 = scalar_lea.sflag [#allocation3], 1
    %11 = vsyncpa %s10, 0
    %12 = vsyncpa [#allocation5], 0
    %s13 = scalar_lea.sflag [#allocation5], 1
    %14 = vsyncpa %s13, 0
    loop: start=0, step=1, limit=4
    $region2: #{tpu_custom_call.1} parent=1 // loop_pre_header
      _
    $region3: #{tpu_custom_call.1} parent=1 // loop_header
      %s16 = sphi 0, %s20
      %p17 = scmp.ge.s32.totalorder %s16, 4
      %s26 = sphi 0, %s28
      %s29 = sphi 0, %s26
      %s30 = sphi 0, %s29
      %s46 = sphi 0, %s30
      %s52 = sphi 0, %s54
      %s55 = sphi 0, %s52
      %s56 = sphi 0, %s55
      %s72 = sphi 0, %s56
      %s76 = sphi 0, %s76
      %s78 = sphi 0, %s76
      %s79 = sphi 0, %s78
      %s93 = sphi 0, %s79
      %s97 = sphi 0, %s97
      %s99 = sphi 0, %s97
      %s100 = sphi 0, %s99
      %s114 = sphi 0, %s100
      %s120 = sphi 0, %s122
      %s123 = sphi 0, %s120
      %s124 = sphi 0, %s123
      %s140 = sphi 0, %s124
    $region4: #{tpu_custom_call.1} parent=1 // loop_header_branch
      %19 = sbr.rel (%p17) target = $region8
    $region5: #{tpu_custom_call.1} parent=1 // loop_body
      %s21 = ssub.s32 %s16, 1
      %s22 = ssub.s32 %s16, 2
      %s23 = sadd.s32 %s16, 1
      %s24 = ssub.s32 %s16, %s23
      %p25 = scmp.eq.s32.totalorder %s24, 0
      %s27 = sadd.s32 %s26, 1
      %s28 = scalar_select %p25, %s26, %s27
      %p31 = pneg %p25
      %p32 = scmp.eq.s32.totalorder %s16, 1
      %p33 = por %p31, %p32
      %p34 = scmp.ne.s32.totalorder %s26, %s29
      %p35 = scmp.eq.s32.totalorder %s16, 0
      %p36 = por %p34, %p35
      %p37 = scmp.ne.s32.totalorder %s26, %s29
      %p38 = scmp.eq.s32.totalorder %s21, 1
      %p39 = por %p37, %p38
      %p40 = scmp.ne.s32.totalorder %s29, %s30
      %p41 = scmp.eq.s32.totalorder %s21, 0
      %p42 = por %p40, %p41
      %p43 = scmp.ne.s32.totalorder %s29, %s30
      %p44 = scmp.eq.s32.totalorder %s22, 1
      %p45 = por %p43, %p44
      %p47 = scmp.ne.s32.totalorder %s30, %s46
      %p48 = scmp.eq.s32.totalorder %s22, 0
      %p49 = por %p47, %p48
      %s50 = ssub.s32 %s16, %s23
      %p51 = scmp.eq.s32.totalorder %s50, 0
      %s53 = sadd.s32 %s52, 1
      %s54 = scalar_select %p51, %s52, %s53
      %p57 = pneg %p51
      %p58 = scmp.eq.s32.totalorder %s16, 1
      %p59 = por %p57, %p58
      %p60 = scmp.ne.s32.totalorder %s52, %s55
      %p61 = scmp.eq.s32.totalorder %s16, 0
      %p62 = por %p60, %p61
      %p63 = scmp.ne.s32.totalorder %s52, %s55
      %p64 = scmp.eq.s32.totalorder %s21, 1
      %p65 = por %p63, %p64
      %p66 = scmp.ne.s32.totalorder %s55, %s56
      %p67 = scmp.eq.s32.totalorder %s21, 0
      %p68 = por %p66, %p67
      %p69 = scmp.ne.s32.totalorder %s55, %s56
      %p70 = scmp.eq.s32.totalorder %s22, 1
      %p71 = por %p69, %p70
      %p73 = scmp.ne.s32.totalorder %s56, %s72
      %p74 = scmp.eq.s32.totalorder %s22, 0
      %p75 = por %p73, %p74
      %s77 = sadd.s32 %s76, 1
      %p80 = scmp.eq.s32.totalorder %s16, 1
      %p81 = scmp.ne.s32.totalorder %s76, %s78
      %p82 = scmp.eq.s32.totalorder %s16, 0
      %p83 = por %p81, %p82
      %p84 = scmp.ne.s32.totalorder %s76, %s78
      %p85 = scmp.eq.s32.totalorder %s21, 1
      %p86 = por %p84, %p85
      %p87 = scmp.ne.s32.totalorder %s78, %s79
      %p88 = scmp.eq.s32.totalorder %s21, 0
      %p89 = por %p87, %p88
      %p90 = scmp.ne.s32.totalorder %s78, %s79
      %p91 = scmp.eq.s32.totalorder %s22, 1
      %p92 = por %p90, %p91
      %p94 = scmp.ne.s32.totalorder %s79, %s93
      %p95 = scmp.eq.s32.totalorder %s22, 0
      %p96 = por %p94, %p95
      %s98 = sadd.s32 %s97, 1
      %p101 = scmp.eq.s32.totalorder %s16, 1
      %p102 = scmp.ne.s32.totalorder %s97, %s99
      %p103 = scmp.eq.s32.totalorder %s16, 0
      %p104 = por %p102, %p103
      %p105 = scmp.ne.s32.totalorder %s97, %s99
      %p106 = scmp.eq.s32.totalorder %s21, 1
      %p107 = por %p105, %p106
      %p108 = scmp.ne.s32.totalorder %s99, %s100
      %p109 = scmp.eq.s32.totalorder %s21, 0
      %p110 = por %p108, %p109
      %p111 = scmp.ne.s32.totalorder %s99, %s100
      %p112 = scmp.eq.s32.totalorder %s22, 1
      %p113 = por %p111, %p112
      %p115 = scmp.ne.s32.totalorder %s100, %s114
      %p116 = scmp.eq.s32.totalorder %s22, 0
      %p117 = por %p115, %p116
      %s118 = ssub.s32 %s16, %s23
      %p119 = scmp.eq.s32.totalorder %s118, 0
      %s121 = sadd.s32 %s120, 1
      %s122 = scalar_select %p119, %s120, %s121
      %p125 = pneg %p119
      %p126 = scmp.eq.s32.totalorder %s16, 1
      %p127 = por %p125, %p126
      %p128 = scmp.ne.s32.totalorder %s120, %s123
      %p129 = scmp.eq.s32.totalorder %s16, 0
      %p130 = por %p128, %p129
      %p131 = scmp.ne.s32.totalorder %s120, %s123
      %p132 = scmp.eq.s32.totalorder %s21, 1
      %p133 = por %p131, %p132
      %p134 = scmp.ne.s32.totalorder %s123, %s124
      %p135 = scmp.eq.s32.totalorder %s21, 0
      %p136 = por %p134, %p135
      %p137 = scmp.ne.s32.totalorder %s123, %s124
      %p138 = scmp.eq.s32.totalorder %s22, 1
      %p139 = por %p137, %p138
      %p141 = scmp.ne.s32.totalorder %s124, %s140
      %p142 = scmp.eq.s32.totalorder %s22, 0
      %p143 = por %p141, %p142
      %p144 = scmp.le.s32.totalorder 1, %s16
      %p145 = scmp.lt.s32.totalorder %s16, 3
      %p146 = pnand %p144, %p145
      %p147 = pneg %p146
      // Predicated region
      $region9: #{tpu_custom_call.1} parent=5 // pred_check
        _
      $region10: #{tpu_custom_call.1} parent=5 // pred_check_branch
        %149 = sbr.rel (%p146) target = $region12
      $region11: #{tpu_custom_call.1} parent=5 // pred_region
        %s150 = ssub.s32 %s16, 1
        // Predicated region
        $region13: #{tpu_custom_call.1} parent=11 // pred_check
          %p151 = pneg %p89
        $region14: #{tpu_custom_call.1} parent=11 // pred_check_branch
          %153 = sbr.rel (%p151) target = $region16
        $region15: #{tpu_custom_call.1} parent=11 // pred_region
          %s155 = ssub.s32 3072, 3072
          %156 = vsyncadd [#allocation5], %s155
          %s157 = sshll.u32 [#allocation6], 4
          %s158 = int_to_ptr.vmem [resolvable:$true] %s157
          %163 = dma.hbm_to_vmem [thread:$0]  %s2, 3072, %s158, [#allocation5], 192, 192, 12
        $region16: #{tpu_custom_call.1} parent=11 // pred_fallthru
          _
        // Predicated region
        $region17: #{tpu_custom_call.1} parent=11 // pred_check
          %p164 = pneg %p110
        $region18: #{tpu_custom_call.1} parent=11 // pred_check_branch
          %166 = sbr.rel (%p164) target = $region20
        $region19: #{tpu_custom_call.1} parent=11 // pred_region
          _
        $region20: #{tpu_custom_call.1} parent=11 // pred_fallthru
          _
      $region12: #{tpu_custom_call.1} parent=5 // pred_fallthru
        _
      %p167 = scmp.lt.s32.totalorder %s16, 2
      // Predicated region
      $region21: #{tpu_custom_call.1} parent=5 // pred_check
        %p168 = pneg %p167
      $region22: #{tpu_custom_call.1} parent=5 // pred_check_branch
        %170 = sbr.rel (%p168) target = $region24
      $region23: #{tpu_custom_call.1} parent=5 // pred_region
        // Predicated region
        $region25: #{tpu_custom_call.1} parent=23 // pred_check
          %p171 = pneg %p36
        $region26: #{tpu_custom_call.1} parent=23 // pred_check_branch
          %173 = sbr.rel (%p171) target = $region28
        $region27: #{tpu_custom_call.1} parent=23 // pred_region
          %s174 = sand.u32 %s26, 1
          %s175 = scalar_lea.sflag [#allocation3], %s174
          %s176 = sand.u32 %s26, 1
          %s177 = smul.addr %s176, 16
          %s178 = scalar_lea.vmem [#allocation2], %s177
          %s179 = smul.u32 4, %s16
          %s181 = ssub.s32 256, 256
          %182 = vsyncadd %s175, %s181
          %s183 = smul.addr %s179, 64
          %s184 = scalar_lea.hbm %s0, %s183
          %s185 = sshll.u32 %s178, 4
          %s186 = int_to_ptr.vmem [resolvable:$true] %s185
          %191 = dma.hbm_to_vmem [thread:$0]  %s184, 256, %s186, %s175, 64, 64, 4
        $region28: #{tpu_custom_call.1} parent=23 // pred_fallthru
          _
        // Predicated region
        $region29: #{tpu_custom_call.1} parent=23 // pred_check
          %p192 = pneg %p62
        $region30: #{tpu_custom_call.1} parent=23 // pred_check_branch
          %194 = sbr.rel (%p192) target = $region32
        $region31: #{tpu_custom_call.1} parent=23 // pred_region
          %s195 = sand.u32 %s16, 1
          %s196 = scalar_lea.sflag [#allocation5], %s195
          %s197 = sand.u32 %s52, 1
          %s198 = smul.addr %s197, 16
          %s199 = scalar_lea.vmem [#allocation4], %s198
          %s200 = smul.u32 4, %s16
          %s202 = ssub.s32 256, 256
          %203 = vsyncadd %s196, %s202
          %s204 = smul.addr %s200, 64
          %s205 = scalar_lea.hbm %s1, %s204
          %s206 = sshll.u32 %s199, 4
          %s207 = int_to_ptr.vmem [resolvable:$true] %s206
          %212 = dma.hbm_to_vmem [thread:$0]  %s205, 256, %s207, %s196, 64, 64, 4
        $region32: #{tpu_custom_call.1} parent=23 // pred_fallthru
          _
      $region24: #{tpu_custom_call.1} parent=5 // pred_fallthru
        _
      %p213 = scmp.le.s32.totalorder 1, %s16
      %p214 = scmp.lt.s32.totalorder %s16, 3
      %p215 = pnand %p213, %p214
      %p216 = pneg %p215
      // Predicated region
      $region33: #{tpu_custom_call.1} parent=5 // pred_check
        _
      $region34: #{tpu_custom_call.1} parent=5 // pred_check_branch
        %218 = sbr.rel (%p215) target = $region36
      $region35: #{tpu_custom_call.1} parent=5 // pred_region
        %s219 = ssub.s32 %s16, 1
        %s220 = sand.u32 %s29, 1
        %s221 = scalar_lea.sflag [#allocation3], %s220
        %s222 = sand.u32 %s29, 1
        %s223 = smul.addr %s222, 16
        %s224 = scalar_lea.vmem [#allocation2], %s223
        // Predicated region
        $region37: #{tpu_custom_call.1} parent=35 // pred_check
          %p225 = pneg %p42
        $region38: #{tpu_custom_call.1} parent=35 // pred_check_branch
          %227 = sbr.rel (%p225) target = $region40
        $region39: #{tpu_custom_call.1} parent=35 // pred_region
          %228 = dma.done %s221, 256
        $region40: #{tpu_custom_call.1} parent=35 // pred_fallthru
          _
        %s229 = sand.u32 %s21, 1
        %s230 = scalar_lea.sflag [#allocation5], %s229
        %s231 = sand.u32 %s55, 1
        %s232 = smul.addr %s231, 16
        %s233 = scalar_lea.vmem [#allocation4], %s232
        // Predicated region
        $region41: #{tpu_custom_call.1} parent=35 // pred_check
          %p234 = pneg %p68
        $region42: #{tpu_custom_call.1} parent=35 // pred_check_branch
          %236 = sbr.rel (%p234) target = $region44
        $region43: #{tpu_custom_call.1} parent=35 // pred_region
          %237 = dma.done %s230, 256
        $region44: #{tpu_custom_call.1} parent=35 // pred_fallthru
          _
        // Predicated region
        $region45: #{tpu_custom_call.1} parent=35 // pred_check
          %p238 = pneg %p89
        $region46: #{tpu_custom_call.1} parent=35 // pred_check_branch
          %240 = sbr.rel (%p238) target = $region48
        $region47: #{tpu_custom_call.1} parent=35 // pred_region
          %241 = dma.done [#allocation5], 3072
        $region48: #{tpu_custom_call.1} parent=35 // pred_fallthru
          _
        %s242 = sand.u32 %s29, 1
        %s243 = scalar_lea.sflag [#allocation3], %s242
        %s244 = sand.u32 %s29, 1
        %s245 = smul.addr %s244, 16
        %s246 = scalar_lea.vmem [#allocation2], %s245
        %p247 = pneg %p42
        %p248 = pneg %p39
        %s249 = sand.u32 %s21, 1
        %s250 = scalar_lea.sflag [#allocation5], %s249
        %s251 = sand.u32 %s55, 1
        %s252 = smul.addr %s251, 16
        %s253 = scalar_lea.vmem [#allocation4], %s252
        %p254 = pneg %p68
        %p255 = pneg %p65
        %p256 = pneg %p89
        %p257 = pneg %p86
        %p258 = pneg %p110
        %p259 = pneg %p107
        %p260 = pneg %p136
        %p261 = pneg %p133
        %s262 = smul.u32 4, %s21
        %p263 = scmp.lt.s32.totalorder %s262, 7
        %s264 = scalar_select %p263, %s262, 7
        %s265 = smul.addr %s264, 8
        %s266 = scalar_lea.vmem %s4, %s265
        %s267 = smul.u32 4, %s21
        %s268 = smul.u32 4, %s21
        %s269 = smul.u32 4, %s21
        %p270 = scmp.lt.s32.totalorder %s269, 7
        %s271 = scalar_select %p270, %s269, 7
        %s272 = smul.addr %s271, 8
        %s273 = scalar_lea.vmem %s4, %s272
        %s274 = smul.u32 4, %s21
        %v276 = vld [vmem:[%s224] sm:$0xf]
        %v277 = vld [vmem:[%s224 + $0x4] sm:$0xf]
        %v278 = vld [vmem:[%s224 + $0x8] sm:$0xf]
        %v279 = vld [vmem:[%s224 + $0xc] sm:$0xf]
        %v280 = vld [vmem:[#allocation6] sm:$0xff]
        %v281 = vld [vmem:[#allocation6 + $0x8] sm:$0xf]
        %v282 = vld [vmem:[#allocation6 + $0xc] sm:$0xff]
        %v283 = vld [vmem:[#allocation6 + $0x14] sm:$0xf]
        %v284 = vld [vmem:[#allocation6 + $0x18] sm:$0xff]
        %v285 = vld [vmem:[#allocation6 + $0x20] sm:$0xf]
        %v286 = vld [vmem:[#allocation6 + $0x24] sm:$0xff]
        %v287 = vld [vmem:[#allocation6 + $0x2c] sm:$0xf]
        %v288 = vld [vmem:[#allocation6 + $0x30] sm:$0xff]
        %v289 = vld [vmem:[#allocation6 + $0x38] sm:$0xf]
        %v290 = vld [vmem:[#allocation6 + $0x3c] sm:$0xff]
        %v291 = vld [vmem:[#allocation6 + $0x44] sm:$0xf]
        %v292 = vld [vmem:[#allocation6 + $0x48] sm:$0xff]
        %v293 = vld [vmem:[#allocation6 + $0x50] sm:$0xf]
        %v294 = vld [vmem:[#allocation6 + $0x54] sm:$0xff]
        %v295 = vld [vmem:[#allocation6 + $0x5c] sm:$0xf]
        %v296 = vld [vmem:[#allocation6 + $0x60] sm:$0xff]
        %v297 = vld [vmem:[#allocation6 + $0x68] sm:$0xf]
        %v298 = vld [vmem:[#allocation6 + $0x6c] sm:$0xff]
        %v299 = vld [vmem:[#allocation6 + $0x74] sm:$0xf]
        %v300 = vld [vmem:[#allocation6 + $0x78] sm:$0xff]
        %v301 = vld [vmem:[#allocation6 + $0x80] sm:$0xf]
        %v302 = vld [vmem:[#allocation6 + $0x84] sm:$0xff]
        %v303 = vld [vmem:[#allocation6 + $0x8c] sm:$0xf]
        %v304 = vld [vmem:[#allocation6 + $0x90] sm:$0xff]
        %v305 = vld [vmem:[#allocation6 + $0x98] sm:$0xf]
        %v306 = vld [vmem:[#allocation6 + $0x9c] sm:$0xff]
        %v307 = vld [vmem:[#allocation6 + $0xa4] sm:$0xf]
        %v308 = vld [vmem:[#allocation6 + $0xa8] sm:$0xff]
        %v309 = vld [vmem:[#allocation6 + $0xb0] sm:$0xf]
        %v310 = vld [vmem:[#allocation6 + $0xb4] sm:$0xff]
        %v311 = vld [vmem:[#allocation6 + $0xbc] sm:$0xf]
        %v316 = vunpack.c.l.b16 %v276
        %v317 = vunpack.c.l.b16 %v277
        %v318 = vunpack.c.l.b16 %v278
        %v319 = vunpack.c.l.b16 %v279
        %v320 = vpack.c.b16 %v317, %v316
        %v321 = vpack.c.b16 %v319, %v318
        %v356 = vunpack.c.l.b16 %v280
        %v357 = vunpack.c.h.b16 %v280
        %v358 = vunpack.c.l.b16 %v281
        %v359 = vunpack.c.l.b16 %v282
        %v360 = vunpack.c.h.b16 %v282
        %v361 = vunpack.c.l.b16 %v283
        %v362 = vunpack.c.l.b16 %v284
        %v363 = vunpack.c.h.b16 %v284
        %v364 = vunpack.c.l.b16 %v285
        %v365 = vunpack.c.l.b16 %v286
        %v366 = vunpack.c.h.b16 %v286
        %v367 = vunpack.c.l.b16 %v287
        %v368 = vunpack.c.l.b16 %v288
        %v369 = vunpack.c.h.b16 %v288
        %v370 = vunpack.c.l.b16 %v289
        %v371 = vunpack.c.l.b16 %v290
        %v372 = vunpack.c.h.b16 %v290
        %v373 = vunpack.c.l.b16 %v291
        %v374 = vunpack.c.l.b16 %v292
        %v375 = vunpack.c.h.b16 %v292
        %v376 = vunpack.c.l.b16 %v293
        %v377 = vunpack.c.l.b16 %v294
        %v378 = vunpack.c.h.b16 %v294
        %v379 = vunpack.c.l.b16 %v295
        %v380 = vunpack.c.l.b16 %v296
        %v381 = vunpack.c.h.b16 %v296
        %v382 = vunpack.c.l.b16 %v297
        %v383 = vunpack.c.l.b16 %v298
        %v384 = vunpack.c.h.b16 %v298
        %v385 = vunpack.c.l.b16 %v299
        %v386 = vunpack.c.l.b16 %v300
        %v387 = vunpack.c.h.b16 %v300
        %v388 = vunpack.c.l.b16 %v301
        %v389 = vunpack.c.l.b16 %v302
        %v390 = vunpack.c.h.b16 %v302
        %v391 = vunpack.c.l.b16 %v303
        %v392 = vunpack.c.l.b16 %v304
        %v393 = vunpack.c.h.b16 %v304
        %v394 = vunpack.c.l.b16 %v305
        %v395 = vunpack.c.l.b16 %v306
        %v396 = vunpack.c.h.b16 %v306
        %v397 = vunpack.c.l.b16 %v307
        %v398 = vunpack.c.l.b16 %v308
        %v399 = vunpack.c.h.b16 %v308
        %v400 = vunpack.c.l.b16 %v309
        %v401 = vunpack.c.l.b16 %v310
        %v402 = vunpack.c.h.b16 %v310
        %v403 = vunpack.c.l.b16 %v311
        %v404 = vpack.c.b16 %v359, %v356
        %v405 = vpack.c.b16 %v360, %v357
        %v406 = vpack.c.b16 %v361, %v358
        %v407 = vpack.c.b16 %v365, %v362
        %v408 = vpack.c.b16 %v366, %v363
        %v409 = vpack.c.b16 %v367, %v364
        %v410 = vpack.c.b16 %v371, %v368
        %v411 = vpack.c.b16 %v372, %v369
        %v412 = vpack.c.b16 %v373, %v370
        %v413 = vpack.c.b16 %v377, %v374
        %v414 = vpack.c.b16 %v378, %v375
        %v415 = vpack.c.b16 %v379, %v376
        %v416 = vpack.c.b16 %v383, %v380
        %v417 = vpack.c.b16 %v384, %v381
        %v418 = vpack.c.b16 %v385, %v382
        %v419 = vpack.c.b16 %v389, %v386
        %v420 = vpack.c.b16 %v390, %v387
        %v421 = vpack.c.b16 %v391, %v388
        %v422 = vpack.c.b16 %v395, %v392
        %v423 = vpack.c.b16 %v396, %v393
        %v424 = vpack.c.b16 %v397, %v394
        %v425 = vpack.c.b16 %v401, %v398
        %v426 = vpack.c.b16 %v402, %v399
        %v427 = vpack.c.b16 %v403, %v400
        %452 = vmatprep.subr.bf16.mxu0 %v405
        %453 = vmatpush1.bf16.msra.mxu0 %v404
        %454 = vmatprep.subr.bf16.mxu0 %v408
        %455 = vmatpush1.bf16.msra.mxu0 %v407
        %456 = vmatprep.subr.bf16.mxu0 %v411
        %457 = vmatpush1.bf16.msra.mxu0 %v410
        %458 = vmatprep.subr.bf16.mxu0 %v414
        %459 = vmatpush1.bf16.msra.mxu0 %v413
        %460 = vmatprep.subr.bf16.mxu0 %v417
        %461 = vmatpush1.bf16.msra.mxu0 %v416
        %462 = vmatprep.subr.bf16.mxu0 %v420
        %463 = vmatpush1.bf16.msra.mxu0 %v419
        %464 = vmatprep.subr.bf16.mxu0 %v423
        %465 = vmatpush1.bf16.msra.mxu0 %v422
        %466 = vmatprep.subr.bf16.mxu0 %v426
        %467 = vmatpush1.bf16.msra.mxu0 %v425
        %468 = vmatprep.subr.bf16.mxu0 0
        %469 = vmatpush1.bf16.msra.mxu0 0
        %470 = vmatprep.subr.bf16.mxu0 0
        %471 = vmatpush1.bf16.msra.mxu0 0
        %472 = vmatprep.subr.bf16.mxu0 0
        %473 = vmatpush1.bf16.msra.mxu0 0
        %474 = vmatprep.subr.bf16.mxu0 0
        %475 = vmatpush1.bf16.msra.mxu0 0
        %476 = vmatprep.subr.bf16.mxu0 0
        %477 = vmatpush1.bf16.msra.mxu0 0
        %478 = vmatprep.subr.bf16.mxu0 0
        %479 = vmatpush1.bf16.msra.mxu0 0
        %480 = vmatprep.subr.bf16.mxu0 0
        %481 = vmatpush1.bf16.msra.mxu0 0
        %482 = vmatprep.subr.bf16.mxu0 0
        %483 = vmatpush1.bf16.msra.mxu0 0
        %484 = vmatprep.mubr.bf16.mxu0 0
        %485 = vmatmul.mubr.bf16.gmra.mrb[0].mxu0 %v320
        %v486 = vpop.f32.mrb[0].mxu0
        %v487 = vadd.f32 0.0, %v486
        %v488 = vpop.f32.mrb[0].mxu0
        %v489 = vadd.f32 0.0, %v488
        %v490 = vpop.f32.mrb[0].mxu0
        %v491 = vadd.f32 0.0, %v490
        %v492 = vpop.f32.mrb[0].mxu0
        %v493 = vadd.f32 0.0, %v492
        %494 = vmatprep.mubr.bf16.mxu0 0
        %495 = vmatmul.mubr.bf16.gmra.mrb[0].mxu0 %v321
        %v496 = vpop.f32.mrb[0].mxu0
        %v497 = vadd.f32 0.0, %v496
        %v498 = vpop.f32.mrb[0].mxu0
        %v499 = vadd.f32 0.0, %v498
        %v500 = vpop.f32.mrb[0].mxu0
        %v501 = vadd.f32 0.0, %v500
        %v502 = vpop.f32.mrb[0].mxu0
        %v503 = vadd.f32 0.0, %v502
        %504 = vdwg.mxu0
        %505 = vmatprep.subr.bf16.mxu0 0
        %506 = vmatpush1.bf16.msra.mxu0 %v406
        %507 = vmatprep.subr.bf16.mxu0 0
        %508 = vmatpush1.bf16.msra.mxu0 %v409
        %509 = vmatprep.subr.bf16.mxu0 0
        %510 = vmatpush1.bf16.msra.mxu0 %v412
        %511 = vmatprep.subr.bf16.mxu0 0
        %512 = vmatpush1.bf16.msra.mxu0 %v415
        %513 = vmatprep.subr.bf16.mxu0 0
        %514 = vmatpush1.bf16.msra.mxu0 %v418
        %515 = vmatprep.subr.bf16.mxu0 0
        %516 = vmatpush1.bf16.msra.mxu0 %v421
        %517 = vmatprep.subr.bf16.mxu0 0
        %518 = vmatpush1.bf16.msra.mxu0 %v424
        %519 = vmatprep.subr.bf16.mxu0 0
        %520 = vmatpush1.bf16.msra.mxu0 %v427
        %521 = vmatprep.subr.bf16.mxu0 0
        %522 = vmatpush1.bf16.msra.mxu0 0
        %523 = vmatprep.subr.bf16.mxu0 0
        %524 = vmatpush1.bf16.msra.mxu0 0
        %525 = vmatprep.subr.bf16.mxu0 0
        %526 = vmatpush1.bf16.msra.mxu0 0
        %527 = vmatprep.subr.bf16.mxu0 0
        %528 = vmatpush1.bf16.msra.mxu0 0
        %529 = vmatprep.subr.bf16.mxu0 0
        %530 = vmatpush1.bf16.msra.mxu0 0
        %531 = vmatprep.subr.bf16.mxu0 0
        %532 = vmatpush1.bf16.msra.mxu0 0
        %533 = vmatprep.subr.bf16.mxu0 0
        %534 = vmatpush1.bf16.msra.mxu0 0
        %535 = vmatprep.subr.bf16.mxu0 0
        %536 = vmatpush1.bf16.msra.mxu0 0
        %537 = vmatprep.mubr.bf16.mxu0 0
        %538 = vmatmul.mubr.bf16.gmra.mrb[0].mxu0 %v320
        %v539 = vpop.f32.mrb[0].mxu0
        %v540 = vadd.f32 0.0, %v539
        %v541 = vpop.f32.mrb[0].mxu0
        %v542 = vpop.f32.mrb[0].mxu0
        %v543 = vadd.f32 0.0, %v542
        %v544 = vpop.f32.mrb[0].mxu0
        %545 = vmatprep.mubr.bf16.mxu0 0
        %546 = vmatmul.mubr.bf16.gmra.mrb[0].mxu0 %v321
        %v547 = vpop.f32.mrb[0].mxu0
        %v548 = vadd.f32 0.0, %v547
        %v549 = vpop.f32.mrb[0].mxu0
        %v550 = vpop.f32.mrb[0].mxu0
        %v551 = vadd.f32 0.0, %v550
        %v552 = vpop.f32.mrb[0].mxu0
        %553 = vdwg.mxu0
        %v554 = vld [vmem:[%s233] sm:$0xf]
        %v555 = vld [vmem:[%s233 + $0x4] sm:$0xf]
        %v556 = vld [vmem:[%s233 + $0x8] sm:$0xf]
        %v557 = vld [vmem:[%s233 + $0xc] sm:$0xf]
        %v558 = vunpack.c.l.bf16 %v554
        %v559 = vunpack.c.l.bf16 %v555
        %v560 = vunpack.c.l.bf16 %v556
        %v561 = vunpack.c.l.bf16 %v557
        %v562 = vld [vmem:[%s3] sm:$0x7]
        %v563 = vmul.f32 %v487, %v558
        %v564 = vmul.f32 %v491, %v559
        %v565 = vmul.f32 %v497, %v560
        %v566 = vmul.f32 %v501, %v561
        %567 = vadd.xlane.f32.xlu0 %v563
        %v568 = vpop.xlane.xlu0 %567
        %569 = vadd.xlane.f32.xlu0 %v564
        %v570 = vpop.xlane.xlu0 %569
        %571 = vadd.xlane.f32.xlu0 %v565
        %v572 = vpop.xlane.xlu0 %571
        %573 = vadd.xlane.f32.xlu0 %v566
        %v574 = vpop.xlane.xlu0 %573
        %v575 = vlaneseq
        %v576 = vshrl.u32 %v575, 7
        %v577 = vsub.s32 0, %v576
        %v578 = vrot.slane %v562, %v577
        %v579 = vmul.f32 %v568, %v578
        %v580 = vmul.f32 %v570, %v578
        %v581 = vmul.f32 %v572, %v578
        %v582 = vmul.f32 %v574, %v578
        %v583 = vadd.f32 %v579, 0.0
        %v584 = vadd.f32 %v580, 0.0
        %v585 = vadd.f32 %v581, 0.0
        %v586 = vadd.f32 %v582, 0.0
        %v587 = vmul.f32 %v489, %v558
        %v588 = vmul.f32 %v493, %v559
        %v589 = vmul.f32 %v499, %v560
        %v590 = vmul.f32 %v503, %v561
        %591 = vadd.xlane.f32.xlu0 %v587
        %v592 = vpop.xlane.xlu0 %591
        %593 = vadd.xlane.f32.xlu0 %v588
        %v594 = vpop.xlane.xlu0 %593
        %595 = vadd.xlane.f32.xlu0 %v589
        %v596 = vpop.xlane.xlu0 %595
        %597 = vadd.xlane.f32.xlu0 %v590
        %v598 = vpop.xlane.xlu0 %597
        %v599 = vlaneseq
        %v600 = vshrl.u32 %v599, 7
        %v601 = vsub.s32 1, %v600
        %v602 = vrot.slane %v562, %v601
        %v603 = vmul.f32 %v592, %v602
        %v604 = vmul.f32 %v594, %v602
        %v605 = vmul.f32 %v596, %v602
        %v606 = vmul.f32 %v598, %v602
        %v607 = vadd.f32 %v583, %v603
        %v608 = vadd.f32 %v584, %v604
        %v609 = vadd.f32 %v585, %v605
        %v610 = vadd.f32 %v586, %v606
        %v611 = vmul.f32 %v540, %v558
        %v612 = vmul.f32 %v543, %v559
        %v613 = vmul.f32 %v548, %v560
        %v614 = vmul.f32 %v551, %v561
        %615 = vadd.xlane.f32.xlu0 %v611
        %v616 = vpop.xlane.xlu0 %615
        %617 = vadd.xlane.f32.xlu0 %v612
        %v618 = vpop.xlane.xlu0 %617
        %619 = vadd.xlane.f32.xlu0 %v613
        %v620 = vpop.xlane.xlu0 %619
        %621 = vadd.xlane.f32.xlu0 %v614
        %v622 = vpop.xlane.xlu0 %621
        %v623 = vlaneseq
        %v624 = vshrl.u32 %v623, 7
        %v625 = vsub.s32 2, %v624
        %v626 = vrot.slane %v562, %v625
        %v627 = vmul.f32 %v616, %v626
        %v628 = vmul.f32 %v618, %v626
        %v629 = vmul.f32 %v620, %v626
        %v630 = vmul.f32 %v622, %v626
        %v631 = vadd.f32 %v607, %v627
        %v632 = vadd.f32 %v608, %v628
        %v633 = vadd.f32 %v609, %v629
        %v634 = vadd.f32 %v610, %v630
        %v635 = vmax.f32 %v631, 0.0
        %v636 = vmax.f32 %v632, 0.0
        %v637 = vmax.f32 %v633, 0.0
        %v638 = vmax.f32 %v634, 0.0
        %vm639 = vcmask 39936
        %640 = vst.msk [vmem:[%s273] sm:$0xff] %vm639, %v635
        %641 = vst.msk [vmem:[%s273 + $0x8] sm:$0xff] %vm639, %v636
        %642 = vst.msk [vmem:[%s273 + $0x10] sm:$0xff] %vm639, %v637
        %643 = vst.msk [vmem:[%s273 + $0x18] sm:$0xff] %vm639, %v638
        %s644 = smul.u32 4, %s21
        %p645 = scmp.lt.s32.totalorder %s644, 7
        %s646 = scalar_select %p645, %s644, 7
        %s647 = smul.addr %s646, 8
        %s648 = scalar_lea.vmem %s4, %s647
        // Predicated region
        $region49: #{tpu_custom_call.1} parent=35 // pred_check
          %p649 = pneg %p133
        $region50: #{tpu_custom_call.1} parent=35 // pred_check_branch
          %651 = sbr.rel (%p649) target = $region52
        $region51: #{tpu_custom_call.1} parent=35 // pred_region
          %s652 = smul.u32 4, %s21
        $region52: #{tpu_custom_call.1} parent=35 // pred_fallthru
          _
      $region36: #{tpu_custom_call.1} parent=5 // pred_fallthru
        _
      %p653 = scmp.le.s32.totalorder 2, %s16
      // Predicated region
      $region53: #{tpu_custom_call.1} parent=5 // pred_check
        %p654 = pneg %p653
      $region54: #{tpu_custom_call.1} parent=5 // pred_check_branch
        %656 = sbr.rel (%p654) target = $region56
      $region55: #{tpu_custom_call.1} parent=5 // pred_region
        %s657 = ssub.s32 %s16, 2
        // Predicated region
        $region57: #{tpu_custom_call.1} parent=55 // pred_check
          %p658 = pneg %p139
        $region58: #{tpu_custom_call.1} parent=55 // pred_check_branch
          %660 = sbr.rel (%p658) target = $region60
        $region59: #{tpu_custom_call.1} parent=55 // pred_region
          %s661 = smul.u32 4, %s22
          %p662 = scmp.lt.s32.totalorder %s661, 7
          %s663 = scalar_select %p662, %s661, 7
          %s664 = smul.addr %s663, 8
          %s665 = scalar_lea.vmem %s4, %s664
        $region60: #{tpu_custom_call.1} parent=55 // pred_fallthru
          _
      $region56: #{tpu_custom_call.1} parent=5 // pred_fallthru
        _
    $region6: #{tpu_custom_call.1} parent=1 // loop_footer
      %s20 = sadd.s32 1, %s16
    $region7: #{tpu_custom_call.1} parent=1 // loop_footer_branch
      %15 = sbr.rel target = $region3
    $region8: #{tpu_custom_call.1} parent=1 // loop_exit
      _
    %666 = vsyncpa [#allocation3], 1
    %s667 = scalar_lea.sflag [#allocation3], 1
    %668 = vsyncpa %s667, 1
    %669 = vsyncpa [#allocation5], 1
    %s670 = scalar_lea.sflag [#allocation5], 1
    %671 = vsyncpa %s670, 1

</llo_original>
